<compile_context>
chip_gen: v5e
topology: v5e:2x2
jax: 0.10.0
libtpu: 0.0.40
codegen_flags: <defaults>
</compile_context>

<pallas_src>
import functools

import jax
import jax.numpy as jnp
import numpy as np
from jax.experimental import pallas as pl
from jax.experimental.pallas import tpu as pltpu


def _mlp_kernel(x_ref, w1_ref, b1_ref, w2_ref, b2_ref, w3_ref, b3_ref,
                o_ref, h1_acc):
    """Fused 3-layer MLP; the layer-1 matmul is K-tiled over grid axis 1."""
    k = pl.program_id(1)

    @pl.when(k == 0)
    def _init():
        # Fold the first bias into the accumulator init (f32).
        h1_acc[...] = jnp.broadcast_to(b1_ref[...], h1_acc.shape)

    # Layer 1 partial product for this K slab (bf16 operands, f32 accumulate).
    h1_acc[...] += jnp.dot(x_ref[...], w1_ref[...],
                           preferred_element_type=jnp.float32)

    @pl.when(k == pl.num_programs(1) - 1)
    def _finalize():
        h1 = jnp.maximum(h1_acc[...], 0.0).astype(w2_ref.dtype)
        h2 = jnp.dot(h1, w2_ref[...], preferred_element_type=jnp.float32)
        h2 = jnp.maximum(h2 + b2_ref[...], 0.0).astype(w3_ref.dtype)
        out = jnp.dot(h2, w3_ref[...], preferred_element_type=jnp.float32)
        o_ref[...] = (out + b3_ref[...]).astype(o_ref.dtype)


def _round_up(n, m):
    return (n + m - 1) // m * m


def _pick_k_tile(dim, target):
    """Largest multiple of 128 that divides `dim` and is <= target (dim if smaller)."""
    if dim <= target:
        return dim
    t = max(128, (target // 128) * 128)
    while dim % t:
        t -= 128
    return t


def _pad2d(a, rows, cols, dtype):
    r, c = a.shape
    a = a.astype(dtype)
    if (r, c) != (rows, cols):
        a = jnp.pad(a, ((0, rows - r), (0, cols - c)))
    return a


@functools.partial(jax.jit, static_argnames=("block_b", "tk"))
def concept2clip_stylegan_forward(x, params, *, block_b=None, tk=None):
    """Forward pass of Concept2CLIPStyleGAN.

    Args:
        x: (B, n_style_layers, layer_dim) float32 W+ tensor.
        params: dict with w1 (in,h), b1 (1,h), w2 (h,h), b2 (1,h),
                w3 (h,clip), b3 (1,clip)  (weights stored transposed, f32).
        block_b: optional batch tile (rounded to a multiple of 8).
        tk: optional K tile for streaming w1 (snapped to a divisor of padded in_dim).
    Returns:
        (B, clip_dim) float32 array.
    """
    B = x.shape[0]
    x2d = x.reshape(B, -1)                       # == torch .view(B, -1)
    in_dim = x2d.shape[1]
    hidden = params["w1"].shape[1]
    clip_dim = params["w3"].shape[1]

    # Lane-dense (128-aligned) feature dims; zero padding is exact through ReLU.
    in_pad = _round_up(in_dim, 128)
    hid_pad = _round_up(hidden, 128)
    clip_pad = _round_up(clip_dim, 128)

    if block_b is None:
        block_b = min(_round_up(B, 8), 256)      # one step for small B, 256 rows for large
    block_b = _round_up(block_b, 8)
    B_pad = _round_up(B, block_b)

    tk = _pick_k_tile(in_pad, tk if tk is not None else 512)
    nk = in_pad // tk

    f32, bf16 = jnp.float32, jnp.bfloat16
    xp = _pad2d(x2d, B_pad, in_pad, bf16)
    w1 = _pad2d(params["w1"], in_pad, hid_pad, bf16)
    b1 = _pad2d(params["b1"], 1, hid_pad, f32)
    w2 = _pad2d(params["w2"], hid_pad, hid_pad, bf16)
    b2 = _pad2d(params["b2"], 1, hid_pad, f32)
    w3 = _pad2d(params["w3"], hid_pad, clip_pad, bf16)
    b3 = _pad2d(params["b3"], 1, clip_pad, f32)

    const = lambda shape: pl.BlockSpec(shape, lambda i, k: (0, 0))

    out = pl.pallas_call(
        _mlp_kernel,
        out_shape=jax.ShapeDtypeStruct((B_pad, clip_pad), jnp.float32),
        grid_spec=pltpu.PrefetchScalarGridSpec(
            num_scalar_prefetch=0,
            grid=(B_pad // block_b, nk),
            in_specs=[
                pl.BlockSpec((block_b, tk), lambda i, k: (i, k)),    # x tile
                pl.BlockSpec((tk, hid_pad), lambda i, k: (k, 0)),    # w1 K-slab (streamed)
                const((1, hid_pad)),                                 # b1
                const((hid_pad, hid_pad)),                           # w2 (resident)
                const((1, hid_pad)),                                 # b2
                const((hid_pad, clip_pad)),                          # w3 (resident)
                const((1, clip_pad)),                                # b3
            ],
            out_specs=pl.BlockSpec((block_b, clip_pad), lambda i, k: (i, 0)),
            scratch_shapes=[pltpu.VMEM((block_b, hid_pad), jnp.float32)],
        ),
        compiler_params=pltpu.CompilerParams(
            dimension_semantics=("parallel", "arbitrary"),
            vmem_limit_bytes=48 * 1024 * 1024,
        ),
    )(xp, w1, b1, w2, b2, w3, b3)

    return out[:B, :clip_dim]


def init_params(key, n_style_layers, layer_dim, clip_dim):
    """Deterministic init mimicking torch.nn.Linear defaults (uniform +-1/sqrt(fan_in)).

    Weights are stored transposed: (in_features, out_features), float32."""
    in_dim = n_style_layers * layer_dim
    hidden = (in_dim + clip_dim) // 2

    def linear(key, fan_in, fan_out):
        kw, kb = jax.random.split(key)
        bound = 1.0 / np.sqrt(fan_in)
        w = jax.random.uniform(kw, (fan_in, fan_out), jnp.float32, -bound, bound)
        b = jax.random.uniform(kb, (1, fan_out), jnp.float32, -bound, bound)
        return w, b

    k1, k2, k3 = jax.random.split(key, 3)
    w1, b1 = linear(k1, in_dim, hidden)
    w2, b2 = linear(k2, hidden, hidden)
    w3, b3 = linear(k3, hidden, clip_dim)
    return {"w1": w1, "b1": b1, "w2": w2, "b2": b2, "w3": w3, "b3": b3}


def reference_forward(x, params):
    """Plain JAX reference matching the kernel's bf16-matmul / f32-accumulate."""
    def linear(h, w, b):
        return jnp.dot(h.astype(jnp.bfloat16), w.astype(jnp.bfloat16),
                       preferred_element_type=jnp.float32) + b

    x2d = x.reshape(x.shape[0], -1)
    h1 = jnp.maximum(linear(x2d, params["w1"], params["b1"]), 0.0)
    h2 = jnp.maximum(linear(h1, params["w2"], params["b2"]), 0.0)
    return linear(h2, params["w3"], params["b3"])


if __name__ == "__main__":
    # Small shapes consistent with the module's forward:
    # batch=16, n_style_layers=4, layer_dim=64, clip_dim=32
    #   -> in_dim = 256, hidden = (256 + 32) // 2 = 144
    B, n_style_layers, layer_dim, clip_dim = 16, 4, 64, 32

    key = jax.random.PRNGKey(0)
    kx, kp = jax.random.split(key)
    x = jax.random.normal(kx, (B, n_style_layers, layer_dim), jnp.float32)
    params = init_params(kp, n_style_layers, layer_dim, clip_dim)

    # tk=128 -> two K steps, exercising the accumulator init/finalize path.
    out = concept2clip_stylegan_forward(x, params, tk=128)
    out = jax.block_until_ready(out)
    assert out.shape == (B, clip_dim)

    ref = jax.block_until_ready(reference_forward(x, params))
    np.testing.assert_allclose(np.asarray(out), np.asarray(ref),
                               rtol=1e-3, atol=1e-3)

    print("KERNEL_OK")
</pallas_src>

<mosaic_0001>
module attributes {stable_mosaic.version = 11 : i64} {
  func.func @_mlp_kernel(%arg0: i32, %arg1: i32, %arg2: memref<16x128xbf16, #tpu.memory_space<vmem>>, %arg3: memref<128x256xbf16, #tpu.memory_space<vmem>>, %arg4: memref<1x256xf32, #tpu.memory_space<vmem>>, %arg5: memref<256x256xbf16, #tpu.memory_space<vmem>>, %arg6: memref<1x256xf32, #tpu.memory_space<vmem>>, %arg7: memref<256x128xbf16, #tpu.memory_space<vmem>>, %arg8: memref<1x128xf32, #tpu.memory_space<vmem>>, %arg9: memref<16x128xf32, #tpu.memory_space<vmem>>, %arg10: memref<16x256xf32, #tpu.memory_space<vmem>>) attributes {dimension_semantics = [#tpu.dimension_semantics<parallel>, #tpu.dimension_semantics<arbitrary>], iteration_bounds = array<i64: 1, 2>, scalar_prefetch = 0 : i64, scratch_operands = 1 : i64, tpu.core_type = #tpu.core_type<tc>, window_params = [{transform_indices = @transform_0, window_bounds = array<i64: 16, 128>}, {transform_indices = @transform_1, window_bounds = array<i64: 128, 256>}, {pipeline_mode = #tpu.pipeline_mode<synchronous>, transform_indices = @transform_2, window_bounds = array<i64: 1, 256>}, {pipeline_mode = #tpu.pipeline_mode<synchronous>, transform_indices = @transform_3, window_bounds = array<i64: 256, 256>}, {pipeline_mode = #tpu.pipeline_mode<synchronous>, transform_indices = @transform_4, window_bounds = array<i64: 1, 256>}, {pipeline_mode = #tpu.pipeline_mode<synchronous>, transform_indices = @transform_5, window_bounds = array<i64: 256, 128>}, {pipeline_mode = #tpu.pipeline_mode<synchronous>, transform_indices = @transform_6, window_bounds = array<i64: 1, 128>}, {transform_indices = @transform_7, window_bounds = array<i64: 16, 128>}]} {
    %c0_i32 = arith.constant 0 : i32
    %0 = arith.cmpi eq, %arg1, %c0_i32 : i32
    %1 = arith.extui %0 : i1 to i32
    %c0_i32_0 = arith.constant 0 : i32
    %2 = arith.cmpi ne, %1, %c0_i32_0 : i32
    scf.if %2 {
      %c0_9 = arith.constant 0 : index
      %c0_10 = arith.constant 0 : index
      %12 = vector.load %arg4[%c0_9, %c0_10] : memref<1x256xf32, #tpu.memory_space<vmem>>, vector<1x256xf32>
      %13 = vector.shape_cast %12 : vector<1x256xf32> to vector<1x256xf32>
      %14 = vector.broadcast %13 : vector<1x256xf32> to vector<16x256xf32>
      %c0_11 = arith.constant 0 : index
      %c0_12 = arith.constant 0 : index
      %15 = vector.load %arg10[%c0_11, %c0_12] : memref<16x256xf32, #tpu.memory_space<vmem>>, vector<16x256xf32>
      tpu.vector_store %arg10[%c0_11, %c0_12], %14 {strides = array<i32>} : memref<16x256xf32, #tpu.memory_space<vmem>>, vector<16x256xf32>,
    } else {
    }
    %c0 = arith.constant 0 : index
    %c0_1 = arith.constant 0 : index
    %3 = vector.load %arg10[%c0, %c0_1] : memref<16x256xf32, #tpu.memory_space<vmem>>, vector<16x256xf32>
    %c0_2 = arith.constant 0 : index
    %c0_3 = arith.constant 0 : index
    %4 = vector.load %arg2[%c0_2, %c0_3] : memref<16x128xbf16, #tpu.memory_space<vmem>>, vector<16x128xbf16>
    %c0_4 = arith.constant 0 : index
    %c0_5 = arith.constant 0 : index
    %5 = vector.load %arg3[%c0_4, %c0_5] : memref<128x256xbf16, #tpu.memory_space<vmem>>, vector<128x256xbf16>
    %cst = arith.constant dense<0.000000e+00> : vector<16x256xf32>
    %6 = tpu.matmul %4, %5, %cst {dimension_numbers = #tpu.dot_dimension_numbers<[1], [0], [0], [1], [0, 0, 1, 1], [], []>} : vector<16x128xbf16>, vector<128x256xbf16>, vector<16x256xf32> -> vector<16x256xf32>
    %7 = arith.addf %3, %6 : vector<16x256xf32>
    %c0_6 = arith.constant 0 : index
    %c0_7 = arith.constant 0 : index
    %8 = vector.load %arg10[%c0_6, %c0_7] : memref<16x256xf32, #tpu.memory_space<vmem>>, vector<16x256xf32>
    tpu.vector_store %arg10[%c0_6, %c0_7], %7 {strides = array<i32>} : memref<16x256xf32, #tpu.memory_space<vmem>>, vector<16x256xf32>,
    %c1_i32 = arith.constant 1 : i32
    %9 = arith.cmpi eq, %arg1, %c1_i32 : i32
    %10 = arith.extui %9 : i1 to i32
    %c0_i32_8 = arith.constant 0 : i32
    %11 = arith.cmpi ne, %10, %c0_i32_8 : i32
    scf.if %11 {
      %c0_9 = arith.constant 0 : index
      %c0_10 = arith.constant 0 : index
      %12 = vector.load %arg10[%c0_9, %c0_10] : memref<16x256xf32, #tpu.memory_space<vmem>>, vector<16x256xf32>
      %cst_11 = arith.constant 0.000000e+00 : f32
      %13 = vector.broadcast %cst_11 : f32 to vector<16x256xf32>
      %14 = arith.maximumf %12, %13 : vector<16x256xf32>
      %15 = arith.truncf %14 : vector<16x256xf32> to vector<16x256xbf16>
      %c0_12 = arith.constant 0 : index
      %c0_13 = arith.constant 0 : index
      %16 = vector.load %arg5[%c0_12, %c0_13] : memref<256x256xbf16, #tpu.memory_space<vmem>>, vector<256x256xbf16>
      %cst_14 = arith.constant dense<0.000000e+00> : vector<16x256xf32>
      %17 = tpu.matmul %15, %16, %cst_14 {dimension_numbers = #tpu.dot_dimension_numbers<[1], [0], [0], [1], [0, 0, 1, 1], [], []>} : vector<16x256xbf16>, vector<256x256xbf16>, vector<16x256xf32> -> vector<16x256xf32>
      %c0_15 = arith.constant 0 : index
      %c0_16 = arith.constant 0 : index
      %18 = vector.load %arg6[%c0_15, %c0_16] : memref<1x256xf32, #tpu.memory_space<vmem>>, vector<1x256xf32>
      %19 = vector.broadcast %18 : vector<1x256xf32> to vector<16x256xf32>
      %20 = arith.addf %17, %19 : vector<16x256xf32>
      %cst_17 = arith.constant 0.000000e+00 : f32
      %21 = vector.broadcast %cst_17 : f32 to vector<16x256xf32>
      %22 = arith.maximumf %20, %21 : vector<16x256xf32>
      %23 = arith.truncf %22 : vector<16x256xf32> to vector<16x256xbf16>
      %c0_18 = arith.constant 0 : index
      %c0_19 = arith.constant 0 : index
      %24 = vector.load %arg7[%c0_18, %c0_19] : memref<256x128xbf16, #tpu.memory_space<vmem>>, vector<256x128xbf16>
      %cst_20 = arith.constant dense<0.000000e+00> : vector<16x128xf32>
      %25 = tpu.matmul %23, %24, %cst_20 {dimension_numbers = #tpu.dot_dimension_numbers<[1], [0], [0], [1], [0, 0, 1, 1], [], []>} : vector<16x256xbf16>, vector<256x128xbf16>, vector<16x128xf32> -> vector<16x128xf32>
      %c0_21 = arith.constant 0 : index
      %c0_22 = arith.constant 0 : index
      %26 = vector.load %arg8[%c0_21, %c0_22] : memref<1x128xf32, #tpu.memory_space<vmem>>, vector<1x128xf32>
      %27 = vector.broadcast %26 : vector<1x128xf32> to vector<16x128xf32>
      %28 = arith.addf %25, %27 : vector<16x128xf32>
      %c0_23 = arith.constant 0 : index
      %c0_24 = arith.constant 0 : index
      %29 = vector.load %arg9[%c0_23, %c0_24] : memref<16x128xf32, #tpu.memory_space<vmem>>, vector<16x128xf32>
      tpu.vector_store %arg9[%c0_23, %c0_24], %28 {strides = array<i32>} : memref<16x128xf32, #tpu.memory_space<vmem>>, vector<16x128xf32>,
    } else {
    }
    return
  }
  func.func @transform_0(%arg0: i32, %arg1: i32) -> (i32, i32) {
    %c0_i32 = arith.constant 0 : i32
    return %arg0, %arg1 : i32, i32
  }
  func.func @transform_1(%arg0: i32, %arg1: i32) -> (i32, i32) {
    %c0_i32 = arith.constant 0 : i32
    %c0_i32_0 = arith.constant 0 : i32
    return %arg1, %c0_i32 : i32, i32
  }
  func.func @transform_2(%arg0: i32, %arg1: i32) -> (i32, i32) {
    %c0_i32 = arith.constant 0 : i32
    %c0_i32_0 = arith.constant 0 : i32
    %c0_i32_1 = arith.constant 0 : i32
    return %c0_i32, %c0_i32_0 : i32, i32
  }
  func.func @transform_3(%arg0: i32, %arg1: i32) -> (i32, i32) {
    %c0_i32 = arith.constant 0 : i32
    %c0_i32_0 = arith.constant 0 : i32
    %c0_i32_1 = arith.constant 0 : i32
    return %c0_i32, %c0_i32_0 : i32, i32
  }
  func.func @transform_4(%arg0: i32, %arg1: i32) -> (i32, i32) {
    %c0_i32 = arith.constant 0 : i32
    %c0_i32_0 = arith.constant 0 : i32
    %c0_i32_1 = arith.constant 0 : i32
    return %c0_i32, %c0_i32_0 : i32, i32
  }
  func.func @transform_5(%arg0: i32, %arg1: i32) -> (i32, i32) {
    %c0_i32 = arith.constant 0 : i32
    %c0_i32_0 = arith.constant 0 : i32
    %c0_i32_1 = arith.constant 0 : i32
    return %c0_i32, %c0_i32_0 : i32, i32
  }
  func.func @transform_6(%arg0: i32, %arg1: i32) -> (i32, i32) {
    %c0_i32 = arith.constant 0 : i32
    %c0_i32_0 = arith.constant 0 : i32
    %c0_i32_1 = arith.constant 0 : i32
    return %c0_i32, %c0_i32_0 : i32, i32
  }
  func.func @transform_7(%arg0: i32, %arg1: i32) -> (i32, i32) {
    %c0_i32 = arith.constant 0 : i32
    %c0_i32_0 = arith.constant 0 : i32
    return %arg0, %c0_i32 : i32, i32
  }
}

</mosaic_0001>

<llo_original>
// kernel: concept2clip_stylegan_forward.1
$region0: #{concept2clip_stylegan_forward.1}
  #allocation0 [shape = 'u32[]', space=smem, size = 0x4, offset = 0x4, fixed_abs, tag = 'smem constant byte address 0x4 - core index']
  #allocation1 [shape = 'u32[72,128]{1,0:T(1,128)}', space=vmem, size = 0x9000, scoped, tag = 'internal scratch']
  #allocation2 [shape = 'f32[16,256]{1,0:T(8,128)}', space=vmem, size = 0x4000, scoped, tag = 'scratch operand']
  %s0 = inlined_call_operand.vmem [shape: bf16[16,256], index: 0, kind: input, shape index: {}]
  %s1 = inlined_call_operand.vmem [shape: bf16[256,256], index: 1, kind: input, shape index: {}]
  %s2 = inlined_call_operand.vmem [shape: f32[1,256], index: 2, kind: input, shape index: {}]
  %s3 = inlined_call_operand.vmem [shape: bf16[256,256], index: 3, kind: input, shape index: {}]
  %s4 = inlined_call_operand.vmem [shape: f32[1,256], index: 4, kind: input, shape index: {}]
  %s5 = inlined_call_operand.vmem [shape: bf16[256,128], index: 5, kind: input, shape index: {}]
  %s6 = inlined_call_operand.vmem [shape: f32[1,128], index: 6, kind: input, shape index: {}]
  %s7 = inlined_call_operand.hbm [shape: f32[16,128], index: 7, kind: output, shape index: {}]
  %s8 = sld [smem:[#allocation0]]
  $region110: #{concept2clip_stylegan_forward.1} parent=0
    _
  %s10 = ssub.s32 1, %s8
  %s11 = scalar_select 0, %s10, %s8
  $region1: #{concept2clip_stylegan_forward.1} parent=0
    #allocation3 [shape = 'u8[8192]{0}', space=vmem, size = 0x2000, scoped, tag = 'input window, operand 0']
    #allocation4 [shape = 'u8[8192]{0}', space=vmem, size = 0x2000, scoped, tag = 'output window, operand 0, single buffered']
    #allocation5 [shape = 's32[2]{0}', space=sflag, size = 0x8, scoped, tag = 'scoped memory for concept2clip_stylegan_forward.1']
    %12 = vsyncpa [#allocation5], 0
    loop: start=0, step=1, limit=4
    $region2: #{concept2clip_stylegan_forward.1} parent=1 // loop_pre_header
      _
    $region3: #{concept2clip_stylegan_forward.1} parent=1 // loop_header
      %s14 = sphi 0, %s18
      %p15 = scmp.ge.s32.totalorder %s14, 4
      %s21 = sphi 0, %s33
      %s22 = sphi 0, %s29
      %s23 = sphi 0, %s21
      %s24 = sphi 0, %s22
      %s25 = sphi 0, %s23
      %s26 = sphi 0, %s24
      %s38 = sphi 0, %s40
      %s41 = sphi 0, %s38
      %s42 = sphi 0, %s41
      %s58 = sphi 0, %s42
      %s64 = sphi 0, %s66
      %s67 = sphi 0, %s64
      %s68 = sphi 0, %s67
      %s84 = sphi 0, %s68
      %s88 = sphi 0, %s88
      %s90 = sphi 0, %s88
      %s91 = sphi 0, %s90
      %s105 = sphi 0, %s91
      %s109 = sphi 0, %s109
      %s111 = sphi 0, %s109
      %s112 = sphi 0, %s111
      %s126 = sphi 0, %s112
      %s130 = sphi 0, %s130
      %s132 = sphi 0, %s130
      %s133 = sphi 0, %s132
      %s147 = sphi 0, %s133
      %s151 = sphi 0, %s151
      %s153 = sphi 0, %s151
      %s154 = sphi 0, %s153
      %s168 = sphi 0, %s154
      %s172 = sphi 0, %s172
      %s174 = sphi 0, %s172
      %s175 = sphi 0, %s174
      %s189 = sphi 0, %s175
      %s195 = sphi 0, %s197
      %s198 = sphi 0, %s195
      %s199 = sphi 0, %s198
      %s215 = sphi 0, %s199
    $region4: #{concept2clip_stylegan_forward.1} parent=1 // loop_header_branch
      %17 = sbr.rel (%p15) target = $region8
    $region5: #{concept2clip_stylegan_forward.1} parent=1 // loop_body
      %s19 = ssub.s32 %s14, 1
      %s20 = ssub.s32 %s14, 2
      %s27 = sadd.s32 1, %s22
      %p28 = scmp.ge.s32.totalorder %s27, 2
      %s29 = scalar_select %p28, 0, %s27
      %s30 = sadd.s32 1, %s21
      %s31 = scalar_select %p28, %s30, %s21
      %p32 = scmp.ge.s32.totalorder %s31, 1
      %s33 = scalar_select %p32, 0, %s31
      %s34 = ssub.s32 %s21, %s33
      %s35 = ssub.s32 %s22, %s29
      %s36 = sor.u32 %s34, %s35
      %p37 = scmp.eq.s32.totalorder %s36, 0
      %s39 = sadd.s32 %s38, 1
      %s40 = scalar_select %p37, %s38, %s39
      %p43 = pneg %p37
      %p44 = scmp.eq.s32.totalorder %s14, 1
      %p45 = por %p43, %p44
      %p46 = scmp.ne.s32.totalorder %s38, %s41
      %p47 = scmp.eq.s32.totalorder %s14, 0
      %p48 = por %p46, %p47
      %p49 = scmp.ne.s32.totalorder %s38, %s41
      %p50 = scmp.eq.s32.totalorder %s19, 1
      %p51 = por %p49, %p50
      %p52 = scmp.ne.s32.totalorder %s41, %s42
      %p53 = scmp.eq.s32.totalorder %s19, 0
      %p54 = por %p52, %p53
      %p55 = scmp.ne.s32.totalorder %s41, %s42
      %p56 = scmp.eq.s32.totalorder %s20, 1
      %p57 = por %p55, %p56
      %p59 = scmp.ne.s32.totalorder %s42, %s58
      %p60 = scmp.eq.s32.totalorder %s20, 0
      %p61 = por %p59, %p60
      %s62 = ssub.s32 %s22, %s29
      %p63 = scmp.eq.s32.totalorder %s62, 0
      %s65 = sadd.s32 %s64, 1
      %s66 = scalar_select %p63, %s64, %s65
      %p69 = pneg %p63
      %p70 = scmp.eq.s32.totalorder %s14, 1
      %p71 = por %p69, %p70
      %p72 = scmp.ne.s32.totalorder %s64, %s67
      %p73 = scmp.eq.s32.totalorder %s14, 0
      %p74 = por %p72, %p73
      %p75 = scmp.ne.s32.totalorder %s64, %s67
      %p76 = scmp.eq.s32.totalorder %s19, 1
      %p77 = por %p75, %p76
      %p78 = scmp.ne.s32.totalorder %s67, %s68
      %p79 = scmp.eq.s32.totalorder %s19, 0
      %p80 = por %p78, %p79
      %p81 = scmp.ne.s32.totalorder %s67, %s68
      %p82 = scmp.eq.s32.totalorder %s20, 1
      %p83 = por %p81, %p82
      %p85 = scmp.ne.s32.totalorder %s68, %s84
      %p86 = scmp.eq.s32.totalorder %s20, 0
      %p87 = por %p85, %p86
      %s89 = sadd.s32 %s88, 1
      %p92 = scmp.eq.s32.totalorder %s14, 1
      %p93 = scmp.ne.s32.totalorder %s88, %s90
      %p94 = scmp.eq.s32.totalorder %s14, 0
      %p95 = por %p93, %p94
      %p96 = scmp.ne.s32.totalorder %s88, %s90
      %p97 = scmp.eq.s32.totalorder %s19, 1
      %p98 = por %p96, %p97
      %p99 = scmp.ne.s32.totalorder %s90, %s91
      %p100 = scmp.eq.s32.totalorder %s19, 0
      %p101 = por %p99, %p100
      %p102 = scmp.ne.s32.totalorder %s90, %s91
      %p103 = scmp.eq.s32.totalorder %s20, 1
      %p104 = por %p102, %p103
      %p106 = scmp.ne.s32.totalorder %s91, %s105
      %p107 = scmp.eq.s32.totalorder %s20, 0
      %p108 = por %p106, %p107
      %s110 = sadd.s32 %s109, 1
      %p113 = scmp.eq.s32.totalorder %s14, 1
      %p114 = scmp.ne.s32.totalorder %s109, %s111
      %p115 = scmp.eq.s32.totalorder %s14, 0
      %p116 = por %p114, %p115
      %p117 = scmp.ne.s32.totalorder %s109, %s111
      %p118 = scmp.eq.s32.totalorder %s19, 1
      %p119 = por %p117, %p118
      %p120 = scmp.ne.s32.totalorder %s111, %s112
      %p121 = scmp.eq.s32.totalorder %s19, 0
      %p122 = por %p120, %p121
      %p123 = scmp.ne.s32.totalorder %s111, %s112
      %p124 = scmp.eq.s32.totalorder %s20, 1
      %p125 = por %p123, %p124
      %p127 = scmp.ne.s32.totalorder %s112, %s126
      %p128 = scmp.eq.s32.totalorder %s20, 0
      %p129 = por %p127, %p128
      %s131 = sadd.s32 %s130, 1
      %p134 = scmp.eq.s32.totalorder %s14, 1
      %p135 = scmp.ne.s32.totalorder %s130, %s132
      %p136 = scmp.eq.s32.totalorder %s14, 0
      %p137 = por %p135, %p136
      %p138 = scmp.ne.s32.totalorder %s130, %s132
      %p139 = scmp.eq.s32.totalorder %s19, 1
      %p140 = por %p138, %p139
      %p141 = scmp.ne.s32.totalorder %s132, %s133
      %p142 = scmp.eq.s32.totalorder %s19, 0
      %p143 = por %p141, %p142
      %p144 = scmp.ne.s32.totalorder %s132, %s133
      %p145 = scmp.eq.s32.totalorder %s20, 1
      %p146 = por %p144, %p145
      %p148 = scmp.ne.s32.totalorder %s133, %s147
      %p149 = scmp.eq.s32.totalorder %s20, 0
      %p150 = por %p148, %p149
      %s152 = sadd.s32 %s151, 1
      %p155 = scmp.eq.s32.totalorder %s14, 1
      %p156 = scmp.ne.s32.totalorder %s151, %s153
      %p157 = scmp.eq.s32.totalorder %s14, 0
      %p158 = por %p156, %p157
      %p159 = scmp.ne.s32.totalorder %s151, %s153
      %p160 = scmp.eq.s32.totalorder %s19, 1
      %p161 = por %p159, %p160
      %p162 = scmp.ne.s32.totalorder %s153, %s154
      %p163 = scmp.eq.s32.totalorder %s19, 0
      %p164 = por %p162, %p163
      %p165 = scmp.ne.s32.totalorder %s153, %s154
      %p166 = scmp.eq.s32.totalorder %s20, 1
      %p167 = por %p165, %p166
      %p169 = scmp.ne.s32.totalorder %s154, %s168
      %p170 = scmp.eq.s32.totalorder %s20, 0
      %p171 = por %p169, %p170
      %s173 = sadd.s32 %s172, 1
      %p176 = scmp.eq.s32.totalorder %s14, 1
      %p177 = scmp.ne.s32.totalorder %s172, %s174
      %p178 = scmp.eq.s32.totalorder %s14, 0
      %p179 = por %p177, %p178
      %p180 = scmp.ne.s32.totalorder %s172, %s174
      %p181 = scmp.eq.s32.totalorder %s19, 1
      %p182 = por %p180, %p181
      %p183 = scmp.ne.s32.totalorder %s174, %s175
      %p184 = scmp.eq.s32.totalorder %s19, 0
      %p185 = por %p183, %p184
      %p186 = scmp.ne.s32.totalorder %s174, %s175
      %p187 = scmp.eq.s32.totalorder %s20, 1
      %p188 = por %p186, %p187
      %p190 = scmp.ne.s32.totalorder %s175, %s189
      %p191 = scmp.eq.s32.totalorder %s20, 0
      %p192 = por %p190, %p191
      %s193 = ssub.s32 %s21, %s33
      %p194 = scmp.eq.s32.totalorder %s193, 0
      %s196 = sadd.s32 %s195, 1
      %s197 = scalar_select %p194, %s195, %s196
      %p200 = pneg %p194
      %p201 = scmp.eq.s32.totalorder %s14, 1
      %p202 = por %p200, %p201
      %p203 = scmp.ne.s32.totalorder %s195, %s198
      %p204 = scmp.eq.s32.totalorder %s14, 0
      %p205 = por %p203, %p204
      %p206 = scmp.ne.s32.totalorder %s195, %s198
      %p207 = scmp.eq.s32.totalorder %s19, 1
      %p208 = por %p206, %p207
      %p209 = scmp.ne.s32.totalorder %s198, %s199
      %p210 = scmp.eq.s32.totalorder %s19, 0
      %p211 = por %p209, %p210
      %p212 = scmp.ne.s32.totalorder %s198, %s199
      %p213 = scmp.eq.s32.totalorder %s20, 1
      %p214 = por %p212, %p213
      %p216 = scmp.ne.s32.totalorder %s199, %s215
      %p217 = scmp.eq.s32.totalorder %s20, 0
      %p218 = por %p216, %p217
      %p219 = scmp.le.s32.totalorder 1, %s14
      %p220 = scmp.lt.s32.totalorder %s14, 3
      %p221 = pnand %p219, %p220
      %p222 = pneg %p221
      // Predicated region
      $region9: #{concept2clip_stylegan_forward.1} parent=5 // pred_check
        _
      $region10: #{concept2clip_stylegan_forward.1} parent=5 // pred_check_branch
        %224 = sbr.rel (%p221) target = $region12
      $region11: #{concept2clip_stylegan_forward.1} parent=5 // pred_region
        %s225 = ssub.s32 %s14, 1
        // Predicated region
        $region13: #{concept2clip_stylegan_forward.1} parent=11 // pred_check
          %p226 = pneg %p101
        $region14: #{concept2clip_stylegan_forward.1} parent=11 // pred_check_branch
          %228 = sbr.rel (%p226) target = $region16
        $region15: #{concept2clip_stylegan_forward.1} parent=11 // pred_region
          _
        $region16: #{concept2clip_stylegan_forward.1} parent=11 // pred_fallthru
          _
        // Predicated region
        $region17: #{concept2clip_stylegan_forward.1} parent=11 // pred_check
          %p229 = pneg %p122
        $region18: #{concept2clip_stylegan_forward.1} parent=11 // pred_check_branch
          %231 = sbr.rel (%p229) target = $region20
        $region19: #{concept2clip_stylegan_forward.1} parent=11 // pred_region
          _
        $region20: #{concept2clip_stylegan_forward.1} parent=11 // pred_fallthru
          _
        // Predicated region
        $region21: #{concept2clip_stylegan_forward.1} parent=11 // pred_check
          %p232 = pneg %p143
        $region22: #{concept2clip_stylegan_forward.1} parent=11 // pred_check_branch
          %234 = sbr.rel (%p232) target = $region24
        $region23: #{concept2clip_stylegan_forward.1} parent=11 // pred_region
          _
        $region24: #{concept2clip_stylegan_forward.1} parent=11 // pred_fallthru
          _
        // Predicated region
        $region25: #{concept2clip_stylegan_forward.1} parent=11 // pred_check
          %p235 = pneg %p164
        $region26: #{concept2clip_stylegan_forward.1} parent=11 // pred_check_branch
          %237 = sbr.rel (%p235) target = $region28
        $region27: #{concept2clip_stylegan_forward.1} parent=11 // pred_region
          _
        $region28: #{concept2clip_stylegan_forward.1} parent=11 // pred_fallthru
          _
        // Predicated region
        $region29: #{concept2clip_stylegan_forward.1} parent=11 // pred_check
          %p238 = pneg %p185
        $region30: #{concept2clip_stylegan_forward.1} parent=11 // pred_check_branch
          %240 = sbr.rel (%p238) target = $region32
        $region31: #{concept2clip_stylegan_forward.1} parent=11 // pred_region
          _
        $region32: #{concept2clip_stylegan_forward.1} parent=11 // pred_fallthru
          _
      $region12: #{concept2clip_stylegan_forward.1} parent=5 // pred_fallthru
        _
      %p241 = scmp.lt.s32.totalorder %s14, 2
      // Predicated region
      $region33: #{concept2clip_stylegan_forward.1} parent=5 // pred_check
        %p242 = pneg %p241
      $region34: #{concept2clip_stylegan_forward.1} parent=5 // pred_check_branch
        %244 = sbr.rel (%p242) target = $region36
      $region35: #{concept2clip_stylegan_forward.1} parent=5 // pred_region
        // Predicated region
        $region37: #{concept2clip_stylegan_forward.1} parent=35 // pred_check
          %p245 = pneg %p48
        $region38: #{concept2clip_stylegan_forward.1} parent=35 // pred_check_branch
          %247 = sbr.rel (%p245) target = $region40
        $region39: #{concept2clip_stylegan_forward.1} parent=35 // pred_region
          %s248 = sand.u32 %s38, 1
          %s249 = sand.u32 %s38, 1
          %s250 = smul.addr %s249, 8
          %s251 = scalar_lea.vmem [#allocation3], %s250
          %s252 = smul.u32 2, %s21
          %s253 = smul.addr %s252, 2
          %s254 = sadd.s32 %s22, %s253
          %s255 = smul.addr %s254, 4
          %s256 = scalar_lea.vmem %s0, %s255
          // Predicated region
          $region41: #{concept2clip_stylegan_forward.1} parent=39 // pred_check
            _
          $region42: #{concept2clip_stylegan_forward.1} parent=39 // pred_check_branch
            %258 = sbr.rel (0) target = $region44
          $region43: #{concept2clip_stylegan_forward.1} parent=39 // pred_region
            // Predicated region
            $region45: #{concept2clip_stylegan_forward.1} parent=43 // pred_check
              _
            $region46: #{concept2clip_stylegan_forward.1} parent=43 // pred_check_branch
              %260 = sbr.rel target = $region48
            $region47: #{concept2clip_stylegan_forward.1} parent=43 // pred_region
              // Predicated region
              $region60: #{concept2clip_stylegan_forward.1} parent=47 // pred_check
                _
              $region61: #{concept2clip_stylegan_forward.1} parent=47 // pred_check_branch
                %278 = sbr.rel (0) target = $region63
              $region62: #{concept2clip_stylegan_forward.1} parent=47 // pred_region
                loop: start=0, step=1, limit=1
                $region64: #{concept2clip_stylegan_forward.1} parent=62 // loop_pre_header
                  _
                $region65: #{concept2clip_stylegan_forward.1} parent=62 // loop_header
                  %s280 = sphi 0, %s284
                  %p281 = scmp.ge.s32.totalorder %s280, 1
                  %s285 = sphi %s256, %s256
                  %s286 = sphi %s251, %s251
                $region66: #{concept2clip_stylegan_forward.1} parent=62 // loop_header_branch
                  %283 = sbr.rel (%p281) target = $region70
                $region67: #{concept2clip_stylegan_forward.1} parent=62 // loop_body
                  _
                $region68: #{concept2clip_stylegan_forward.1} parent=62 // loop_footer
                  %s284 = sadd.s32 1, %s280
                $region69: #{concept2clip_stylegan_forward.1} parent=62 // loop_footer_branch
                  %279 = sbr.rel target = $region65
                $region70: #{concept2clip_stylegan_forward.1} parent=62 // loop_exit
                  _
                %s288 = ssub.s32 16, 1
                loop: start=0, step=1, limit=1
                $region71: #{concept2clip_stylegan_forward.1} parent=62 // loop_pre_header
                  _
                $region72: #{concept2clip_stylegan_forward.1} parent=62 // loop_header
                  %s290 = sphi 0, %s294
                  %p291 = scmp.ge.s32.totalorder %s290, 1
                  %s295 = sphi %s256, %s256
                  %s296 = sphi %s251, %s251
                $region73: #{concept2clip_stylegan_forward.1} parent=62 // loop_header_branch
                  %293 = sbr.rel (%p291) target = $region77
                $region74: #{concept2clip_stylegan_forward.1} parent=62 // loop_body
                  %v297 = vld [vmem:[%s295] sm:%s288]
                  %298 = vst [vmem:[%s296] sm:%s288] %v297
                  %v299 = vld [vmem:[%s295 + $0x8] sm:%s288]
                  %300 = vst [vmem:[%s296 + $0x4] sm:%s288] %v299
                $region75: #{concept2clip_stylegan_forward.1} parent=62 // loop_footer
                  %s294 = sadd.s32 1, %s290
                $region76: #{concept2clip_stylegan_forward.1} parent=62 // loop_footer_branch
                  %289 = sbr.rel target = $region72
                $region77: #{concept2clip_stylegan_forward.1} parent=62 // loop_exit
                  _
              $region63: #{concept2clip_stylegan_forward.1} parent=47 // pred_fallthru
                _
            $region48: #{concept2clip_stylegan_forward.1} parent=43 // pred_fallthru
              _
            // Predicated region
            $region49: #{concept2clip_stylegan_forward.1} parent=43 // pred_check
              _
            $region50: #{concept2clip_stylegan_forward.1} parent=43 // pred_check_branch
              %262 = sbr.rel (0) target = $region52
            $region51: #{concept2clip_stylegan_forward.1} parent=43 // pred_region
              %s264 = ssub.s32 16, 1
              loop: start=0, step=1, limit=1
              $region53: #{concept2clip_stylegan_forward.1} parent=51 // loop_pre_header
                _
              $region54: #{concept2clip_stylegan_forward.1} parent=51 // loop_header
                %s266 = sphi 0, %s270
                %p267 = scmp.ge.s32.totalorder %s266, 1
                %s271 = sphi %s256, %s256
                %s272 = sphi %s251, %s251
              $region55: #{concept2clip_stylegan_forward.1} parent=51 // loop_header_branch
                %269 = sbr.rel (%p267) target = $region59
              $region56: #{concept2clip_stylegan_forward.1} parent=51 // loop_body
                %v273 = vld [vmem:[%s271] sm:%s264]
                %274 = vst [vmem:[%s272] sm:%s264] %v273
                %v275 = vld [vmem:[%s271 + $0x8] sm:%s264]
                %276 = vst [vmem:[%s272 + $0x4] sm:%s264] %v275
              $region57: #{concept2clip_stylegan_forward.1} parent=51 // loop_footer
                %s270 = sadd.s32 1, %s266
              $region58: #{concept2clip_stylegan_forward.1} parent=51 // loop_footer_branch
                %265 = sbr.rel target = $region54
              $region59: #{concept2clip_stylegan_forward.1} parent=51 // loop_exit
                _
            $region52: #{concept2clip_stylegan_forward.1} parent=43 // pred_fallthru
              _
          $region44: #{concept2clip_stylegan_forward.1} parent=39 // pred_fallthru
            _
          %301 = vnop
        $region40: #{concept2clip_stylegan_forward.1} parent=35 // pred_fallthru
          _
        // Predicated region
        $region78: #{concept2clip_stylegan_forward.1} parent=35 // pred_check
          %p302 = pneg %p74
        $region79: #{concept2clip_stylegan_forward.1} parent=35 // pred_check_branch
          %304 = sbr.rel (%p302) target = $region81
        $region80: #{concept2clip_stylegan_forward.1} parent=35 // pred_region
          %s305 = smul.u32 16, %s22
          %p306 = scmp.lt.s32.totalorder %s305, 31
          %s307 = scalar_select %p306, %s305, 31
          %s308 = smul.addr %s307, 2
          %s309 = smul.addr %s308, 4
          %s310 = scalar_lea.vmem %s1, %s309
          %s311 = smul.u32 16, %s22
        $region81: #{concept2clip_stylegan_forward.1} parent=35 // pred_fallthru
          _
      $region36: #{concept2clip_stylegan_forward.1} parent=5 // pred_fallthru
        _
      %p312 = scmp.le.s32.totalorder 1, %s14
      %p313 = scmp.lt.s32.totalorder %s14, 3
      %p314 = pnand %p312, %p313
      %p315 = pneg %p314
      // Predicated region
      $region82: #{concept2clip_stylegan_forward.1} parent=5 // pred_check
        _
      $region83: #{concept2clip_stylegan_forward.1} parent=5 // pred_check_branch
        %317 = sbr.rel (%p314) target = $region85
      $region84: #{concept2clip_stylegan_forward.1} parent=5 // pred_region
        %s318 = ssub.s32 %s14, 1
        %s319 = sand.u32 %s41, 1
        %s320 = sand.u32 %s41, 1
        %s321 = smul.addr %s320, 8
        %s322 = scalar_lea.vmem [#allocation3], %s321
        // Predicated region
        $region86: #{concept2clip_stylegan_forward.1} parent=84 // pred_check
          %p323 = pneg %p54
        $region87: #{concept2clip_stylegan_forward.1} parent=84 // pred_check_branch
          %325 = sbr.rel (%p323) target = $region89
        $region88: #{concept2clip_stylegan_forward.1} parent=84 // pred_region
          _
        $region89: #{concept2clip_stylegan_forward.1} parent=84 // pred_fallthru
          _
        %s326 = sand.u32 %s41, 1
        %s327 = sand.u32 %s41, 1
        %s328 = smul.addr %s327, 8
        %s329 = scalar_lea.vmem [#allocation3], %s328
        %p330 = pneg %p54
        %p331 = pneg %p51
        %s332 = smul.u32 16, %s24
        %p333 = scmp.lt.s32.totalorder %s332, 31
        %s334 = scalar_select %p333, %s332, 31
        %s335 = smul.addr %s334, 2
        %s336 = smul.addr %s335, 4
        %s337 = scalar_lea.vmem %s1, %s336
        %p338 = pneg %p80
        %p339 = pneg %p77
        %p340 = pneg %p101
        %p341 = pneg %p98
        %p342 = pneg %p122
        %p343 = pneg %p119
        %p344 = pneg %p143
        %p345 = pneg %p140
        %p346 = pneg %p164
        %p347 = pneg %p161
        %p348 = pneg %p185
        %p349 = pneg %p182
        %p350 = pneg %p211
        %p351 = pneg %p208
        %s352 = smul.u32 2, %s23
        %s353 = smul.u32 16, %s24
        %p354 = scmp.lt.s32.totalorder %s353, 31
        %s355 = scalar_select %p354, %s353, 31
        %s356 = smul.addr %s355, 2
        %s357 = smul.addr %s356, 4
        %s358 = scalar_lea.vmem %s1, %s357
        %s359 = smul.u32 16, %s24
        %s360 = smul.u32 2, %s23
        %p361 = scmp.eq.s32.totalorder %s24, 0
        // Predicated region
        $region90: #{concept2clip_stylegan_forward.1} parent=84 // pred_check
          %p362 = pneg %p361
        $region91: #{concept2clip_stylegan_forward.1} parent=84 // pred_check_branch
          %364 = sbr.rel (%p362) target = $region93
        $region92: #{concept2clip_stylegan_forward.1} parent=84 // pred_region
          %v365 = vld [vmem:[%s2] sm:$0x3]
          %v367 = vperm.slane %v365, 0
          %v368 = vperm.slane %v365, 1
          %371 = vst [vmem:[#allocation2] sm:$0xff] %v367
          %372 = vst [vmem:[#allocation2 + $0x8] sm:$0xff] %v368
          %373 = vst [vmem:[#allocation2 + $0x10] sm:$0xff] %v367
          %374 = vst [vmem:[#allocation2 + $0x18] sm:$0xff] %v368
        $region93: #{concept2clip_stylegan_forward.1} parent=84 // pred_fallthru
          _
        %v375 = vld [vmem:[#allocation2] sm:$0xff]
        %v376 = vld [vmem:[#allocation2 + $0x8] sm:$0xff]
        %v377 = vld [vmem:[#allocation2 + $0x10] sm:$0xff]
        %v378 = vld [vmem:[#allocation2 + $0x18] sm:$0xff]
        %v379 = vld [vmem:[%s322] sm:$0xf]
        %v380 = vld [vmem:[%s322 + $0x4] sm:$0xf]
        %v381 = vld [vmem:[%s358] sm:$0xff]
        %v382 = vld [vmem:[%s358 + $0x8] sm:$0xff]
        %v383 = vld [vmem:[%s358 + $0x10] sm:$0xff]
        %v384 = vld [vmem:[%s358 + $0x18] sm:$0xff]
        %v385 = vld [vmem:[%s358 + $0x20] sm:$0xff]
        %v386 = vld [vmem:[%s358 + $0x28] sm:$0xff]
        %v387 = vld [vmem:[%s358 + $0x30] sm:$0xff]
        %v388 = vld [vmem:[%s358 + $0x38] sm:$0xff]
        %v389 = vld [vmem:[%s358 + $0x40] sm:$0xff]
        %v390 = vld [vmem:[%s358 + $0x48] sm:$0xff]
        %v391 = vld [vmem:[%s358 + $0x50] sm:$0xff]
        %v392 = vld [vmem:[%s358 + $0x58] sm:$0xff]
        %v393 = vld [vmem:[%s358 + $0x60] sm:$0xff]
        %v394 = vld [vmem:[%s358 + $0x68] sm:$0xff]
        %v395 = vld [vmem:[%s358 + $0x70] sm:$0xff]
        %v396 = vld [vmem:[%s358 + $0x78] sm:$0xff]
        %v399 = vunpack.c.l.b16 %v379
        %v400 = vunpack.c.l.b16 %v380
        %v401 = vpack.c.b16 %v400, %v399
        %v419 = vunpack.c.l.b16 %v381
        %v420 = vunpack.c.h.b16 %v381
        %v421 = vunpack.c.l.b16 %v382
        %v422 = vunpack.c.h.b16 %v382
        %v423 = vunpack.c.l.b16 %v383
        %v424 = vunpack.c.h.b16 %v383
        %v425 = vunpack.c.l.b16 %v384
        %v426 = vunpack.c.h.b16 %v384
        %v427 = vunpack.c.l.b16 %v385
        %v428 = vunpack.c.h.b16 %v385
        %v429 = vunpack.c.l.b16 %v386
        %v430 = vunpack.c.h.b16 %v386
        %v431 = vunpack.c.l.b16 %v387
        %v432 = vunpack.c.h.b16 %v387
        %v433 = vunpack.c.l.b16 %v388
        %v434 = vunpack.c.h.b16 %v388
        %v435 = vunpack.c.l.b16 %v389
        %v436 = vunpack.c.h.b16 %v389
        %v437 = vunpack.c.l.b16 %v390
        %v438 = vunpack.c.h.b16 %v390
        %v439 = vunpack.c.l.b16 %v391
        %v440 = vunpack.c.h.b16 %v391
        %v441 = vunpack.c.l.b16 %v392
        %v442 = vunpack.c.h.b16 %v392
        %v443 = vunpack.c.l.b16 %v393
        %v444 = vunpack.c.h.b16 %v393
        %v445 = vunpack.c.l.b16 %v394
        %v446 = vunpack.c.h.b16 %v394
        %v447 = vunpack.c.l.b16 %v395
        %v448 = vunpack.c.h.b16 %v395
        %v449 = vunpack.c.l.b16 %v396
        %v450 = vunpack.c.h.b16 %v396
        %v451 = vpack.c.b16 %v421, %v419
        %v452 = vpack.c.b16 %v422, %v420
        %v453 = vpack.c.b16 %v425, %v423
        %v454 = vpack.c.b16 %v426, %v424
        %v455 = vpack.c.b16 %v429, %v427
        %v456 = vpack.c.b16 %v430, %v428
        %v457 = vpack.c.b16 %v433, %v431
        %v458 = vpack.c.b16 %v434, %v432
        %v459 = vpack.c.b16 %v437, %v435
        %v460 = vpack.c.b16 %v438, %v436
        %v461 = vpack.c.b16 %v441, %v439
        %v462 = vpack.c.b16 %v442, %v440
        %v463 = vpack.c.b16 %v445, %v443
        %v464 = vpack.c.b16 %v446, %v444
        %v465 = vpack.c.b16 %v449, %v447
        %v466 = vpack.c.b16 %v450, %v448
        %483 = vmatpush.bf16.msra.mxu0 %v465
        %484 = vmatpush.bf16.msra.mxu0 %v463
        %485 = vmatpush.bf16.msra.mxu0 %v461
        %486 = vmatpush.bf16.msra.mxu0 %v459
        %487 = vmatpush.bf16.msra.mxu0 %v457
        %488 = vmatpush.bf16.msra.mxu0 %v455
        %489 = vmatpush.bf16.msra.mxu0 %v453
        %490 = vmatpush.bf16.msra.mxu0 %v451
        %491 = vmatmul.bf16.gmra.mxu0 %v401
        %v492 = vpop.f32.mrf.mxu0
        %v493 = vadd.f32 0.0, %v492
        %v494 = vpop.f32.mrf.mxu0
        %v495 = vadd.f32 0.0, %v494
        %496 = vdwg.mxu0
        %497 = vmatpush.bf16.msra.mxu0 %v466
        %498 = vmatpush.bf16.msra.mxu0 %v464
        %499 = vmatpush.bf16.msra.mxu0 %v462
        %500 = vmatpush.bf16.msra.mxu0 %v460
        %501 = vmatpush.bf16.msra.mxu0 %v458
        %502 = vmatpush.bf16.msra.mxu0 %v456
        %503 = vmatpush.bf16.msra.mxu0 %v454
        %504 = vmatpush.bf16.msra.mxu0 %v452
        %505 = vmatmul.bf16.gmra.mxu0 %v401
        %v506 = vpop.f32.mrf.mxu0
        %v507 = vadd.f32 0.0, %v506
        %v508 = vpop.f32.mrf.mxu0
        %v509 = vadd.f32 0.0, %v508
        %510 = vdwg.mxu0
        %v511 = vadd.f32 %v375, %v493
        %v512 = vadd.f32 %v376, %v507
        %v513 = vadd.f32 %v377, %v495
        %v514 = vadd.f32 %v378, %v509
        %515 = vst [vmem:[#allocation2] sm:$0xff] %v511
        %516 = vst [vmem:[#allocation2 + $0x8] sm:$0xff] %v512
        %517 = vst [vmem:[#allocation2 + $0x10] sm:$0xff] %v513
        %518 = vst [vmem:[#allocation2 + $0x18] sm:$0xff] %v514
        %p519 = scmp.eq.s32.totalorder %s24, 1
        // Predicated region
        $region94: #{concept2clip_stylegan_forward.1} parent=84 // pred_check
          %p520 = pneg %p519
        $region95: #{concept2clip_stylegan_forward.1} parent=84 // pred_check_branch
          %522 = sbr.rel (%p520) target = $region97
        $region96: #{concept2clip_stylegan_forward.1} parent=84 // pred_region
          %v523 = vld [vmem:[#allocation2] sm:$0xff]
          %v524 = vld [vmem:[#allocation2 + $0x8] sm:$0xff]
          %v525 = vld [vmem:[#allocation2 + $0x10] sm:$0xff]
          %v526 = vld [vmem:[#allocation2 + $0x18] sm:$0xff]
          %v527 = vmax.f32 %v523, 0.0
          %v528 = vmax.f32 %v524, 0.0
          %v529 = vmax.f32 %v525, 0.0
          %v530 = vmax.f32 %v526, 0.0
          %v531 = vpack.c.bf16 %v529, %v527
          %v532 = vpack.c.bf16 %v530, %v528
          %v533 = vld [vmem:[%s3] sm:$0xff]
          %v534 = vld [vmem:[%s3 + $0x8] sm:$0xff]
          %v535 = vld [vmem:[%s3 + $0x10] sm:$0xff]
          %v536 = vld [vmem:[%s3 + $0x18] sm:$0xff]
          %v537 = vld [vmem:[%s3 + $0x20] sm:$0xff]
          %v538 = vld [vmem:[%s3 + $0x28] sm:$0xff]
          %v539 = vld [vmem:[%s3 + $0x30] sm:$0xff]
          %v540 = vld [vmem:[%s3 + $0x38] sm:$0xff]
          %v541 = vld [vmem:[%s3 + $0x40] sm:$0xff]
          %v542 = vld [vmem:[%s3 + $0x48] sm:$0xff]
          %v543 = vld [vmem:[%s3 + $0x50] sm:$0xff]
          %v544 = vld [vmem:[%s3 + $0x58] sm:$0xff]
          %v545 = vld [vmem:[%s3 + $0x60] sm:$0xff]
          %v546 = vld [vmem:[%s3 + $0x68] sm:$0xff]
          %v547 = vld [vmem:[%s3 + $0x70] sm:$0xff]
          %v548 = vld [vmem:[%s3 + $0x78] sm:$0xff]
          %v549 = vld [vmem:[%s3 + $0x80] sm:$0xff]
          %v550 = vld [vmem:[%s3 + $0x88] sm:$0xff]
          %v551 = vld [vmem:[%s3 + $0x90] sm:$0xff]
          %v552 = vld [vmem:[%s3 + $0x98] sm:$0xff]
          %v553 = vld [vmem:[%s3 + $0xa0] sm:$0xff]
          %v554 = vld [vmem:[%s3 + $0xa8] sm:$0xff]
          %v555 = vld [vmem:[%s3 + $0xb0] sm:$0xff]
          %v556 = vld [vmem:[%s3 + $0xb8] sm:$0xff]
          %v557 = vld [vmem:[%s3 + $0xc0] sm:$0xff]
          %v558 = vld [vmem:[%s3 + $0xc8] sm:$0xff]
          %v559 = vld [vmem:[%s3 + $0xd0] sm:$0xff]
          %v560 = vld [vmem:[%s3 + $0xd8] sm:$0xff]
          %v561 = vld [vmem:[%s3 + $0xe0] sm:$0xff]
          %v562 = vld [vmem:[%s3 + $0xe8] sm:$0xff]
          %v563 = vld [vmem:[%s3 + $0xf0] sm:$0xff]
          %v564 = vld [vmem:[%s3 + $0xf8] sm:$0xff]
          %v565 = vld [vmem:[%s4] sm:$0x3]
          %v567 = vperm.slane %v565, 0
          %v568 = vperm.slane %v565, 1
          %v603 = vunpack.c.l.b16 %v533
          %v604 = vunpack.c.h.b16 %v533
          %v605 = vunpack.c.l.b16 %v534
          %v606 = vunpack.c.h.b16 %v534
          %v607 = vunpack.c.l.b16 %v535
          %v608 = vunpack.c.h.b16 %v535
          %v609 = vunpack.c.l.b16 %v536
          %v610 = vunpack.c.h.b16 %v536
          %v611 = vunpack.c.l.b16 %v537
          %v612 = vunpack.c.h.b16 %v537
          %v613 = vunpack.c.l.b16 %v538
          %v614 = vunpack.c.h.b16 %v538
          %v615 = vunpack.c.l.b16 %v539
          %v616 = vunpack.c.h.b16 %v539
          %v617 = vunpack.c.l.b16 %v540
          %v618 = vunpack.c.h.b16 %v540
          %v619 = vunpack.c.l.b16 %v541
          %v620 = vunpack.c.h.b16 %v541
          %v621 = vunpack.c.l.b16 %v542
          %v622 = vunpack.c.h.b16 %v542
          %v623 = vunpack.c.l.b16 %v543
          %v624 = vunpack.c.h.b16 %v543
          %v625 = vunpack.c.l.b16 %v544
          %v626 = vunpack.c.h.b16 %v544
          %v627 = vunpack.c.l.b16 %v545
          %v628 = vunpack.c.h.b16 %v545
          %v629 = vunpack.c.l.b16 %v546
          %v630 = vunpack.c.h.b16 %v546
          %v631 = vunpack.c.l.b16 %v547
          %v632 = vunpack.c.h.b16 %v547
          %v633 = vunpack.c.l.b16 %v548
          %v634 = vunpack.c.h.b16 %v548
          %v635 = vunpack.c.l.b16 %v549
          %v636 = vunpack.c.h.b16 %v549
          %v637 = vunpack.c.l.b16 %v550
          %v638 = vunpack.c.h.b16 %v550
          %v639 = vunpack.c.l.b16 %v551
          %v640 = vunpack.c.h.b16 %v551
          %v641 = vunpack.c.l.b16 %v552
          %v642 = vunpack.c.h.b16 %v552
          %v643 = vunpack.c.l.b16 %v553
          %v644 = vunpack.c.h.b16 %v553
          %v645 = vunpack.c.l.b16 %v554
          %v646 = vunpack.c.h.b16 %v554
          %v647 = vunpack.c.l.b16 %v555
          %v648 = vunpack.c.h.b16 %v555
          %v649 = vunpack.c.l.b16 %v556
          %v650 = vunpack.c.h.b16 %v556
          %v651 = vunpack.c.l.b16 %v557
          %v652 = vunpack.c.h.b16 %v557
          %v653 = vunpack.c.l.b16 %v558
          %v654 = vunpack.c.h.b16 %v558
          %v655 = vunpack.c.l.b16 %v559
          %v656 = vunpack.c.h.b16 %v559
          %v657 = vunpack.c.l.b16 %v560
          %v658 = vunpack.c.h.b16 %v560
          %v659 = vunpack.c.l.b16 %v561
          %v660 = vunpack.c.h.b16 %v561
          %v661 = vunpack.c.l.b16 %v562
          %v662 = vunpack.c.h.b16 %v562
          %v663 = vunpack.c.l.b16 %v563
          %v664 = vunpack.c.h.b16 %v563
          %v665 = vunpack.c.l.b16 %v564
          %v666 = vunpack.c.h.b16 %v564
          %v667 = vpack.c.b16 %v605, %v603
          %v668 = vpack.c.b16 %v606, %v604
          %v669 = vpack.c.b16 %v609, %v607
          %v670 = vpack.c.b16 %v610, %v608
          %v671 = vpack.c.b16 %v613, %v611
          %v672 = vpack.c.b16 %v614, %v612
          %v673 = vpack.c.b16 %v617, %v615
          %v674 = vpack.c.b16 %v618, %v616
          %v675 = vpack.c.b16 %v621, %v619
          %v676 = vpack.c.b16 %v622, %v620
          %v677 = vpack.c.b16 %v625, %v623
          %v678 = vpack.c.b16 %v626, %v624
          %v679 = vpack.c.b16 %v629, %v627
          %v680 = vpack.c.b16 %v630, %v628
          %v681 = vpack.c.b16 %v633, %v631
          %v682 = vpack.c.b16 %v634, %v632
          %v683 = vpack.c.b16 %v637, %v635
          %v684 = vpack.c.b16 %v638, %v636
          %v685 = vpack.c.b16 %v641, %v639
          %v686 = vpack.c.b16 %v642, %v640
          %v687 = vpack.c.b16 %v645, %v643
          %v688 = vpack.c.b16 %v646, %v644
          %v689 = vpack.c.b16 %v649, %v647
          %v690 = vpack.c.b16 %v650, %v648
          %v691 = vpack.c.b16 %v653, %v651
          %v692 = vpack.c.b16 %v654, %v652
          %v693 = vpack.c.b16 %v657, %v655
          %v694 = vpack.c.b16 %v658, %v656
          %v695 = vpack.c.b16 %v661, %v659
          %v696 = vpack.c.b16 %v662, %v660
          %v697 = vpack.c.b16 %v665, %v663
          %v698 = vpack.c.b16 %v666, %v664
          %731 = vmatpush.bf16.msra.mxu0 %v681
          %732 = vmatpush.bf16.msra.mxu0 %v679
          %733 = vmatpush.bf16.msra.mxu0 %v677
          %734 = vmatpush.bf16.msra.mxu0 %v675
          %735 = vmatpush.bf16.msra.mxu0 %v673
          %736 = vmatpush.bf16.msra.mxu0 %v671
          %737 = vmatpush.bf16.msra.mxu0 %v669
          %738 = vmatpush.bf16.msra.mxu0 %v667
          %739 = vmatmul.bf16.gmra.mxu0 %v531
          %v740 = vpop.f32.mrf.mxu0
          %v741 = vadd.f32 %v567, %v740
          %v742 = vpop.f32.mrf.mxu0
          %v743 = vadd.f32 %v567, %v742
          %744 = vdwg.mxu0
          %745 = vmatpush.bf16.msra.mxu0 %v697
          %746 = vmatpush.bf16.msra.mxu0 %v695
          %747 = vmatpush.bf16.msra.mxu0 %v693
          %748 = vmatpush.bf16.msra.mxu0 %v691
          %749 = vmatpush.bf16.msra.mxu0 %v689
          %750 = vmatpush.bf16.msra.mxu0 %v687
          %751 = vmatpush.bf16.msra.mxu0 %v685
          %752 = vmatpush.bf16.msra.mxu0 %v683
          %753 = vmatmul.bf16.gmra.mxu0 %v532
          %v754 = vpop.f32.mrf.mxu0
          %v755 = vadd.f32 %v741, %v754
          %v756 = vpop.f32.mrf.mxu0
          %v757 = vadd.f32 %v743, %v756
          %758 = vdwg.mxu0
          %759 = vmatpush.bf16.msra.mxu0 %v682
          %760 = vmatpush.bf16.msra.mxu0 %v680
          %761 = vmatpush.bf16.msra.mxu0 %v678
          %762 = vmatpush.bf16.msra.mxu0 %v676
          %763 = vmatpush.bf16.msra.mxu0 %v674
          %764 = vmatpush.bf16.msra.mxu0 %v672
          %765 = vmatpush.bf16.msra.mxu0 %v670
          %766 = vmatpush.bf16.msra.mxu0 %v668
          %767 = vmatmul.bf16.gmra.mxu0 %v531
          %v768 = vpop.f32.mrf.mxu0
          %v769 = vadd.f32 %v568, %v768
          %v770 = vpop.f32.mrf.mxu0
          %v771 = vadd.f32 %v568, %v770
          %772 = vdwg.mxu0
          %773 = vmatpush.bf16.msra.mxu0 %v698
          %774 = vmatpush.bf16.msra.mxu0 %v696
          %775 = vmatpush.bf16.msra.mxu0 %v694
          %776 = vmatpush.bf16.msra.mxu0 %v692
          %777 = vmatpush.bf16.msra.mxu0 %v690
          %778 = vmatpush.bf16.msra.mxu0 %v688
          %779 = vmatpush.bf16.msra.mxu0 %v686
          %780 = vmatpush.bf16.msra.mxu0 %v684
          %781 = vmatmul.bf16.gmra.mxu0 %v532
          %v782 = vpop.f32.mrf.mxu0
          %v783 = vadd.f32 %v769, %v782
          %v784 = vpop.f32.mrf.mxu0
          %v785 = vadd.f32 %v771, %v784
          %786 = vdwg.mxu0
          %v787 = vmax.f32 %v755, 0.0
          %v788 = vmax.f32 %v783, 0.0
          %v789 = vmax.f32 %v757, 0.0
          %v790 = vmax.f32 %v785, 0.0
          %v791 = vpack.c.bf16 %v789, %v787
          %v792 = vpack.c.bf16 %v790, %v788
          %v793 = vld [vmem:[%s5] sm:$0xf]
          %v794 = vld [vmem:[%s5 + $0x4] sm:$0xf]
          %v795 = vld [vmem:[%s5 + $0x8] sm:$0xf]
          %v796 = vld [vmem:[%s5 + $0xc] sm:$0xf]
          %v797 = vld [vmem:[%s5 + $0x10] sm:$0xf]
          %v798 = vld [vmem:[%s5 + $0x14] sm:$0xf]
          %v799 = vld [vmem:[%s5 + $0x18] sm:$0xf]
          %v800 = vld [vmem:[%s5 + $0x1c] sm:$0xf]
          %v801 = vld [vmem:[%s5 + $0x20] sm:$0xf]
          %v802 = vld [vmem:[%s5 + $0x24] sm:$0xf]
          %v803 = vld [vmem:[%s5 + $0x28] sm:$0xf]
          %v804 = vld [vmem:[%s5 + $0x2c] sm:$0xf]
          %v805 = vld [vmem:[%s5 + $0x30] sm:$0xf]
          %v806 = vld [vmem:[%s5 + $0x34] sm:$0xf]
          %v807 = vld [vmem:[%s5 + $0x38] sm:$0xf]
          %v808 = vld [vmem:[%s5 + $0x3c] sm:$0xf]
          %v809 = vld [vmem:[%s5 + $0x40] sm:$0xf]
          %v810 = vld [vmem:[%s5 + $0x44] sm:$0xf]
          %v811 = vld [vmem:[%s5 + $0x48] sm:$0xf]
          %v812 = vld [vmem:[%s5 + $0x4c] sm:$0xf]
          %v813 = vld [vmem:[%s5 + $0x50] sm:$0xf]
          %v814 = vld [vmem:[%s5 + $0x54] sm:$0xf]
          %v815 = vld [vmem:[%s5 + $0x58] sm:$0xf]
          %v816 = vld [vmem:[%s5 + $0x5c] sm:$0xf]
          %v817 = vld [vmem:[%s5 + $0x60] sm:$0xf]
          %v818 = vld [vmem:[%s5 + $0x64] sm:$0xf]
          %v819 = vld [vmem:[%s5 + $0x68] sm:$0xf]
          %v820 = vld [vmem:[%s5 + $0x6c] sm:$0xf]
          %v821 = vld [vmem:[%s5 + $0x70] sm:$0xf]
          %v822 = vld [vmem:[%s5 + $0x74] sm:$0xf]
          %v823 = vld [vmem:[%s5 + $0x78] sm:$0xf]
          %v824 = vld [vmem:[%s5 + $0x7c] sm:$0xf]
          %v825 = vld [vmem:[%s6] sm:$0x1]
          %v827 = vperm.slane %v825, 0
          %v861 = vunpack.c.l.b16 %v793
          %v862 = vunpack.c.l.b16 %v794
          %v863 = vunpack.c.l.b16 %v795
          %v864 = vunpack.c.l.b16 %v796
          %v865 = vunpack.c.l.b16 %v797
          %v866 = vunpack.c.l.b16 %v798
          %v867 = vunpack.c.l.b16 %v799
          %v868 = vunpack.c.l.b16 %v800
          %v869 = vunpack.c.l.b16 %v801
          %v870 = vunpack.c.l.b16 %v802
          %v871 = vunpack.c.l.b16 %v803
          %v872 = vunpack.c.l.b16 %v804
          %v873 = vunpack.c.l.b16 %v805
          %v874 = vunpack.c.l.b16 %v806
          %v875 = vunpack.c.l.b16 %v807
          %v876 = vunpack.c.l.b16 %v808
          %v877 = vunpack.c.l.b16 %v809
          %v878 = vunpack.c.l.b16 %v810
          %v879 = vunpack.c.l.b16 %v811
          %v880 = vunpack.c.l.b16 %v812
          %v881 = vunpack.c.l.b16 %v813
          %v882 = vunpack.c.l.b16 %v814
          %v883 = vunpack.c.l.b16 %v815
          %v884 = vunpack.c.l.b16 %v816
          %v885 = vunpack.c.l.b16 %v817
          %v886 = vunpack.c.l.b16 %v818
          %v887 = vunpack.c.l.b16 %v819
          %v888 = vunpack.c.l.b16 %v820
          %v889 = vunpack.c.l.b16 %v821
          %v890 = vunpack.c.l.b16 %v822
          %v891 = vunpack.c.l.b16 %v823
          %v892 = vunpack.c.l.b16 %v824
          %v893 = vpack.c.b16 %v862, %v861
          %v894 = vpack.c.b16 %v864, %v863
          %v895 = vpack.c.b16 %v866, %v865
          %v896 = vpack.c.b16 %v868, %v867
          %v897 = vpack.c.b16 %v870, %v869
          %v898 = vpack.c.b16 %v872, %v871
          %v899 = vpack.c.b16 %v874, %v873
          %v900 = vpack.c.b16 %v876, %v875
          %v901 = vpack.c.b16 %v878, %v877
          %v902 = vpack.c.b16 %v880, %v879
          %v903 = vpack.c.b16 %v882, %v881
          %v904 = vpack.c.b16 %v884, %v883
          %v905 = vpack.c.b16 %v886, %v885
          %v906 = vpack.c.b16 %v888, %v887
          %v907 = vpack.c.b16 %v890, %v889
          %v908 = vpack.c.b16 %v892, %v891
          %925 = vmatpush.bf16.msra.mxu0 %v900
          %926 = vmatpush.bf16.msra.mxu0 %v899
          %927 = vmatpush.bf16.msra.mxu0 %v898
          %928 = vmatpush.bf16.msra.mxu0 %v897
          %929 = vmatpush.bf16.msra.mxu0 %v896
          %930 = vmatpush.bf16.msra.mxu0 %v895
          %931 = vmatpush.bf16.msra.mxu0 %v894
          %932 = vmatpush.bf16.msra.mxu0 %v893
          %933 = vmatmul.bf16.gmra.mxu0 %v791
          %v934 = vpop.f32.mrf.mxu0
          %v935 = vadd.f32 %v827, %v934
          %v936 = vpop.f32.mrf.mxu0
          %v937 = vadd.f32 %v827, %v936
          %938 = vdwg.mxu0
          %939 = vmatpush.bf16.msra.mxu0 %v908
          %940 = vmatpush.bf16.msra.mxu0 %v907
          %941 = vmatpush.bf16.msra.mxu0 %v906
          %942 = vmatpush.bf16.msra.mxu0 %v905
          %943 = vmatpush.bf16.msra.mxu0 %v904
          %944 = vmatpush.bf16.msra.mxu0 %v903
          %945 = vmatpush.bf16.msra.mxu0 %v902
          %946 = vmatpush.bf16.msra.mxu0 %v901
          %947 = vmatmul.bf16.gmra.mxu0 %v792
          %v948 = vpop.f32.mrf.mxu0
          %v949 = vadd.f32 %v935, %v948
          %v950 = vpop.f32.mrf.mxu0
          %v951 = vadd.f32 %v937, %v950
          %952 = vdwg.mxu0
          %953 = vst [vmem:[#allocation4] sm:$0xff] %v949
          %954 = vst [vmem:[#allocation4 + $0x8] sm:$0xff] %v951
        $region97: #{concept2clip_stylegan_forward.1} parent=84 // pred_fallthru
          _
        // Predicated region
        $region98: #{concept2clip_stylegan_forward.1} parent=84 // pred_check
          %p955 = pneg %p208
        $region99: #{concept2clip_stylegan_forward.1} parent=84 // pred_check_branch
          %957 = sbr.rel (%p955) target = $region101
        $region100: #{concept2clip_stylegan_forward.1} parent=84 // pred_region
          %s958 = smul.u32 2, %s23
          %960 = vsyncadd [#allocation5], 0
          %s961 = smul.addr %s958, 8
          %s962 = scalar_lea.hbm %s7, %s961
          %s963 = sshll.u32 [#allocation4], 4
          %s964 = int_to_ptr.vmem [resolvable:$true] %s963
          %s965 = sshll.u32 %s962, 4
          %s966 = int_to_ptr.hbm [resolvable:$true] %s965
          %971 = dma.vmem_to_hbm [thread:$0]  %s964, 256, %s966, [#allocation5], 128, 128, 8
        $region101: #{concept2clip_stylegan_forward.1} parent=84 // pred_fallthru
          _
        // Predicated region
        $region102: #{concept2clip_stylegan_forward.1} parent=84 // pred_check
          %p972 = pneg %p208
        $region103: #{concept2clip_stylegan_forward.1} parent=84 // pred_check_branch
          %974 = sbr.rel (%p972) target = $region105
        $region104: #{concept2clip_stylegan_forward.1} parent=84 // pred_region
          %976 = dma.done [#allocation5], 256
        $region105: #{concept2clip_stylegan_forward.1} parent=84 // pred_fallthru
          _
      $region85: #{concept2clip_stylegan_forward.1} parent=5 // pred_fallthru
        _
      %p977 = scmp.le.s32.totalorder 2, %s14
      // Predicated region
      $region106: #{concept2clip_stylegan_forward.1} parent=5 // pred_check
        %p978 = pneg %p977
      $region107: #{concept2clip_stylegan_forward.1} parent=5 // pred_check_branch
        %980 = sbr.rel (%p978) target = $region109
      $region108: #{concept2clip_stylegan_forward.1} parent=5 // pred_region
        %s981 = ssub.s32 %s14, 2
      $region109: #{concept2clip_stylegan_forward.1} parent=5 // pred_fallthru
        _
    $region6: #{concept2clip_stylegan_forward.1} parent=1 // loop_footer
      %s18 = sadd.s32 1, %s14
    $region7: #{concept2clip_stylegan_forward.1} parent=1 // loop_footer_branch
      %13 = sbr.rel target = $region3
    $region8: #{concept2clip_stylegan_forward.1} parent=1 // loop_exit
      _
    %982 = vsyncpa [#allocation5], 1
    %s983 = scalar_lea.sflag [#allocation5], 1
    %984 = vsyncpa %s983, 1

</llo_original>
